<compile_context>
chip_gen: v5e
topology: v5e:2x2
jax: 0.10.0
libtpu: 0.0.40
codegen_flags: <defaults>
</compile_context>

<pallas_src>
import jax
import jax.numpy as jnp
from jax.experimental import pallas as pl
from jax.experimental.pallas import tpu as pltpu


# ------------------------------ fused kernel -------------------------------

def _fused_convnet_kernel(x_ref, w1_ref, b1_ref, w2_ref, b2_ref,
                          wl1t_ref, bl1_ref, wl2t_ref, bl2_ref,
                          o_ref, p1_ref):
    """Entire MultiClassConvNet forward for one sample (one grid step).

    x_ref    : (L, Cin)      channels-last input sample
    w1_ref   : (K*Cin, C1)   conv1 weight, row index = k*Cin + ci
    w2_ref   : (K*C1,  C2)   conv2 weight, row index = k*C1  + ci
    wl1t_ref : (P2, H)       linear1 weight, pre-transposed
    wl2t_ref : (H, NC)       linear2 weight, pre-transposed
    b*_ref   : (1, feat)     biases
    o_ref    : (C2, NC)      per-sample log-probabilities
    p1_ref   : (P1, C1)      VMEM scratch: pool1 output (re-read with stride 2)
    """
    cin = x_ref.shape[1]
    p1_len, c1 = p1_ref.shape          # P1, C1
    p2_len = wl1t_ref.shape[0]         # P2
    c2 = w2_ref.shape[1]               # C2
    ksz = w1_ref.shape[0] // cin       # K

    # ---- Conv1d(Cin->C1, k=3) fused with MaxPool1d(2) + ReLU ---------------
    # Even / odd conv output positions are gathered with stride-2 sublane
    # slices of the input ref, so the pooling windows never leave the kernel.
    acc_e = jnp.zeros((p1_len, c1), jnp.float32)
    acc_o = jnp.zeros((p1_len, c1), jnp.float32)
    for k in range(ksz):
        w1k = w1_ref[k * cin:(k + 1) * cin, :]                      # (Cin, C1)
        acc_e = acc_e + jnp.dot(x_ref[pl.ds(k, p1_len, 2), :], w1k,
                                preferred_element_type=jnp.float32)
        acc_o = acc_o + jnp.dot(x_ref[pl.ds(k + 1, p1_len, 2), :], w1k,
                                preferred_element_type=jnp.float32)
    # MaxPool then ReLU (matches the Sequential ordering); bias added once.
    p1_ref[...] = jnp.maximum(jnp.maximum(acc_e, acc_o) + b1_ref[...], 0.0)

    # ---- Conv1d(C1->C2, k=3) fused with MaxPool1d(2) -----------------------
    acc2_e = jnp.zeros((p2_len, c2), jnp.float32)
    acc2_o = jnp.zeros((p2_len, c2), jnp.float32)
    for k in range(ksz):
        w2k = w2_ref[k * c1:(k + 1) * c1, :]                        # (C1, C2)
        acc2_e = acc2_e + jnp.dot(p1_ref[pl.ds(k, p2_len, 2), :], w2k,
                                  preferred_element_type=jnp.float32)
        acc2_o = acc2_o + jnp.dot(p1_ref[pl.ds(k + 1, p2_len, 2), :], w2k,
                                  preferred_element_type=jnp.float32)
    p2 = jnp.maximum(acc2_e, acc2_o) + b2_ref[...]                  # (P2, C2)

    # ---- Linear(P2->H) + ReLU + Linear(H->NC) + LogSoftmax -----------------
    # No Flatten in the original module: the Linears act on the length axis,
    # so rows of the linear stage are the C2 channels of this sample.
    z = p2.T                                                        # (C2, P2)
    h = jnp.dot(z, wl1t_ref[...], preferred_element_type=jnp.float32) + bl1_ref[...]
    h = jnp.maximum(h, 0.0)                                         # (C2, H)
    logits = jnp.dot(h, wl2t_ref[...],
                     preferred_element_type=jnp.float32) + bl2_ref[...]  # (C2, NC)
    m = jnp.max(logits, axis=-1, keepdims=True)
    lse = jnp.log(jnp.sum(jnp.exp(logits - m), axis=-1, keepdims=True)) + m
    o_ref[...] = logits - lse


# --------------------------- parameter preparation --------------------------

def prepare_params(params):
    """One-time (outside the traced forward) conversion of PyTorch-layout
    parameters to the kernel layout: conv weights as (K*Cin, Cout) matrices,
    linear weights pre-transposed, biases as (1, feat) rows."""
    w1, b1, w2, b2, wl1, bl1, wl2, bl2 = params
    c1, cin, k = w1.shape
    c2 = w2.shape[0]
    w1mat = jnp.transpose(w1, (2, 1, 0)).reshape(k * cin, c1)   # [k*Cin+ci, co]
    w2mat = jnp.transpose(w2, (2, 1, 0)).reshape(k * c1, c2)
    return (w1mat, b1.reshape(1, -1),
            w2mat, b2.reshape(1, -1),
            wl1.T, bl1.reshape(1, -1),
            wl2.T, bl2.reshape(1, -1))


# ------------------------------ forward pass --------------------------------

def multiclass_convnet_forward(x, kparams):
    """x: (N, Cin, L) float32 (PyTorch NCW).  Returns (N, C2, num_classes)."""
    w1mat, b1r, w2mat, b2r, wl1t, bl1r, wl2t, bl2r = kparams
    N, Cin, L = x.shape
    C1 = w1mat.shape[1]
    C2 = w2mat.shape[1]
    K = w1mat.shape[0] // Cin
    L1 = L - K + 1
    P1 = L1 // 2
    L2 = P1 - K + 1
    P2 = L2 // 2
    H = wl1t.shape[1]
    NC = wl2t.shape[1]
    # Flatten-less Linear: only valid when the pooled length == in_features.
    assert wl1t.shape[0] == P2, (wl1t.shape[0], P2)

    # Single cheap layout change of the network input (channels-last so the
    # conv contractions are plain row-major matmuls); all other layout work
    # (im2col windows, pooling strides, the p2 transpose) happens in-kernel.
    x_cl = jnp.transpose(x, (0, 2, 1))                       # (N, L, Cin)

    flops = N * (2 * 2 * K * P1 * Cin * C1 + 2 * 2 * K * P2 * C1 * C2
                 + 2 * C2 * P2 * H + 2 * C2 * H * NC)
    bytes_accessed = 4 * (x.size + w1mat.size + b1r.size + w2mat.size + b2r.size
                          + wl1t.size + bl1r.size + wl2t.size + bl2r.size
                          + N * C2 * NC)

    return pl.pallas_call(
        _fused_convnet_kernel,
        out_shape=jax.ShapeDtypeStruct((N, C2, NC), jnp.float32),
        grid_spec=pltpu.PrefetchScalarGridSpec(
            num_scalar_prefetch=0,
            grid=(N,),
            in_specs=[
                pl.BlockSpec((None, L, Cin), lambda n: (n, 0, 0)),   # x (per sample)
                pl.BlockSpec((K * Cin, C1), lambda n: (0, 0)),       # conv1 w
                pl.BlockSpec((1, C1), lambda n: (0, 0)),             # conv1 b
                pl.BlockSpec((K * C1, C2), lambda n: (0, 0)),        # conv2 w
                pl.BlockSpec((1, C2), lambda n: (0, 0)),             # conv2 b
                pl.BlockSpec((P2, H), lambda n: (0, 0)),             # lin1 w^T
                pl.BlockSpec((1, H), lambda n: (0, 0)),              # lin1 b
                pl.BlockSpec((H, NC), lambda n: (0, 0)),             # lin2 w^T
                pl.BlockSpec((1, NC), lambda n: (0, 0)),             # lin2 b
            ],
            out_specs=pl.BlockSpec((None, C2, NC), lambda n: (n, 0, 0)),
            scratch_shapes=[pltpu.VMEM((P1, C1), jnp.float32)],
        ),
        compiler_params=pltpu.CompilerParams(
            dimension_semantics=("parallel",)),    # v7x: batch across 2 TCs
        cost_estimate=pl.CostEstimate(
            flops=flops,
            transcendentals=N * C2 * (NC + 1),
            bytes_accessed=bytes_accessed),
    )(x_cl, w1mat, b1r, w2mat, b2r, wl1t, bl1r, wl2t, bl2r)


# --------------------------- pure-JAX reference -----------------------------

def reference_forward(x, params):
    w1, b1, w2, b2, wl1, bl1, wl2, bl2 = params

    def conv1d(x, w, b):
        K = w.shape[2]
        Lo = x.shape[2] - K + 1
        out = b[None, :, None]
        for k in range(K):
            out = out + jnp.einsum('ncl,oc->nol', x[:, :, k:k + Lo], w[:, :, k])
        return out

    def maxpool(x):
        Lh = x.shape[2] // 2
        return jnp.maximum(x[:, :, 0:2 * Lh:2], x[:, :, 1:2 * Lh:2])

    h = conv1d(x, w1, b1)
    h = jnp.maximum(maxpool(h), 0.0)
    h = conv1d(h, w2, b2)
    h = maxpool(h)
    h = jnp.maximum(h @ wl1.T + bl1, 0.0)
    h = h @ wl2.T + bl2
    return jax.nn.log_softmax(h, axis=-1)


# ---------------------------------- main ------------------------------------

def conv_out_size(slen, kernel_size, stride):
    return int((slen - kernel_size) / stride + 1)


if __name__ == "__main__":
    # Module hyper-parameters (small shapes).
    side_length, C1, C2, hidden, num_classes = 16, 4, 4, 32, 5
    linear_in_side = int(conv_out_size(conv_out_size(side_length, 3, 1) / 2, 3, 1) / 2)
    lin_in_features = C2 * linear_in_side                    # = 8

    # Pick input length so that the (Flatten-less) original forward is valid:
    # pooled length after conv/pool stack must equal lin_in_features (=8) -> L=38.
    N, Cin, L = 2, 10, 38

    key = jax.random.PRNGKey(0)
    ks = jax.random.split(key, 9)

    def uinit(k, shape, fan_in):
        bound = float(fan_in) ** -0.5
        return jax.random.uniform(k, shape, jnp.float32, -bound, bound)

    w1 = uinit(ks[0], (C1, Cin, 3), Cin * 3)
    b1 = uinit(ks[1], (C1,), Cin * 3)
    w2 = uinit(ks[2], (C2, C1, 3), C1 * 3)
    b2 = uinit(ks[3], (C2,), C1 * 3)
    wl1 = uinit(ks[4], (hidden, lin_in_features), lin_in_features)
    bl1 = uinit(ks[5], (hidden,), lin_in_features)
    wl2 = uinit(ks[6], (num_classes, hidden), hidden)
    bl2 = uinit(ks[7], (num_classes,), hidden)
    params = (w1, b1, w2, b2, wl1, bl1, wl2, bl2)

    # One-time weight re-layout (outside the jitted forward).
    kparams = prepare_params(params)

    x = jax.random.normal(ks[8], (N, Cin, L), jnp.float32)

    out = jax.jit(multiclass_convnet_forward)(x, kparams)
    out = jax.block_until_ready(out)

    ref = reference_forward(x, params)
    assert out.shape == (N, C2, num_classes), out.shape
    assert jnp.allclose(out, ref, atol=1e-3, rtol=1e-3), float(jnp.max(jnp.abs(out - ref)))

    print("KERNEL_OK")
</pallas_src>

<mosaic_0001>
module attributes {stable_mosaic.version = 11 : i64} {
  func.func @_fused_convnet_kernel(%arg0: i32, %arg1: memref<1x38x10xf32, #tpu.memory_space<vmem>>, %arg2: memref<30x4xf32, #tpu.memory_space<vmem>>, %arg3: memref<1x4xf32, #tpu.memory_space<vmem>>, %arg4: memref<12x4xf32, #tpu.memory_space<vmem>>, %arg5: memref<1x4xf32, #tpu.memory_space<vmem>>, %arg6: memref<8x32xf32, #tpu.memory_space<vmem>>, %arg7: memref<1x32xf32, #tpu.memory_space<vmem>>, %arg8: memref<32x5xf32, #tpu.memory_space<vmem>>, %arg9: memref<1x5xf32, #tpu.memory_space<vmem>>, %arg10: memref<1x4x5xf32, #tpu.memory_space<vmem>>, %arg11: memref<18x4xf32, #tpu.memory_space<vmem>>) attributes {dimension_semantics = [#tpu.dimension_semantics<parallel>], iteration_bounds = array<i64: 2>, scalar_prefetch = 0 : i64, scratch_operands = 1 : i64, tpu.core_type = #tpu.core_type<tc>, window_params = [{transform_indices = @transform_0, window_bounds = array<i64: 1, 38, 10>}, {pipeline_mode = #tpu.pipeline_mode<synchronous>, transform_indices = @transform_1, window_bounds = array<i64: 30, 4>}, {pipeline_mode = #tpu.pipeline_mode<synchronous>, transform_indices = @transform_2, window_bounds = array<i64: 1, 4>}, {pipeline_mode = #tpu.pipeline_mode<synchronous>, transform_indices = @transform_3, window_bounds = array<i64: 12, 4>}, {pipeline_mode = #tpu.pipeline_mode<synchronous>, transform_indices = @transform_4, window_bounds = array<i64: 1, 4>}, {pipeline_mode = #tpu.pipeline_mode<synchronous>, transform_indices = @transform_5, window_bounds = array<i64: 8, 32>}, {pipeline_mode = #tpu.pipeline_mode<synchronous>, transform_indices = @transform_6, window_bounds = array<i64: 1, 32>}, {pipeline_mode = #tpu.pipeline_mode<synchronous>, transform_indices = @transform_7, window_bounds = array<i64: 32, 5>}, {pipeline_mode = #tpu.pipeline_mode<synchronous>, transform_indices = @transform_8, window_bounds = array<i64: 1, 5>}, {transform_indices = @transform_9, window_bounds = array<i64: 1, 4, 5>}]} {
    %cst = arith.constant 0.000000e+00 : f32
    %0 = vector.broadcast %cst : f32 to vector<18x4xf32>
    %cst_0 = arith.constant 0.000000e+00 : f32
    %1 = vector.broadcast %cst_0 : f32 to vector<18x4xf32>
    %c0 = arith.constant 0 : index
    %c0_1 = arith.constant 0 : index
    %2 = vector.load %arg2[%c0, %c0_1] : memref<30x4xf32, #tpu.memory_space<vmem>>, vector<10x4xf32>
    %c0_2 = arith.constant 0 : index
    %c0_3 = arith.constant 0 : index
    %c0_4 = arith.constant 0 : index
    %3 = tpu.strided_load %arg1[%c0_2, %c0_3, %c0_4] {strides = array<i32: 1, 2, 1>} : memref<1x38x10xf32, #tpu.memory_space<vmem>>, vector<1x18x10xf32>
    %4 = vector.shape_cast %3 : vector<1x18x10xf32> to vector<18x10xf32>
    %cst_5 = arith.constant dense<0.000000e+00> : vector<18x4xf32>
    %5 = tpu.matmul %4, %2, %cst_5 {dimension_numbers = #tpu.dot_dimension_numbers<[1], [0], [0], [1], [0, 0, 1, 1], [], []>} : vector<18x10xf32>, vector<10x4xf32>, vector<18x4xf32> -> vector<18x4xf32>
    %6 = arith.addf %0, %5 : vector<18x4xf32>
    %c0_6 = arith.constant 0 : index
    %c1 = arith.constant 1 : index
    %c0_7 = arith.constant 0 : index
    %7 = tpu.strided_load %arg1[%c0_6, %c1, %c0_7] {strides = array<i32: 1, 2, 1>} : memref<1x38x10xf32, #tpu.memory_space<vmem>>, vector<1x18x10xf32>
    %8 = vector.shape_cast %7 : vector<1x18x10xf32> to vector<18x10xf32>
    %cst_8 = arith.constant dense<0.000000e+00> : vector<18x4xf32>
    %9 = tpu.matmul %8, %2, %cst_8 {dimension_numbers = #tpu.dot_dimension_numbers<[1], [0], [0], [1], [0, 0, 1, 1], [], []>} : vector<18x10xf32>, vector<10x4xf32>, vector<18x4xf32> -> vector<18x4xf32>
    %10 = arith.addf %1, %9 : vector<18x4xf32>
    %c10 = arith.constant 10 : index
    %c0_9 = arith.constant 0 : index
    %11 = vector.load %arg2[%c10, %c0_9] : memref<30x4xf32, #tpu.memory_space<vmem>>, vector<10x4xf32>
    %c0_10 = arith.constant 0 : index
    %c1_11 = arith.constant 1 : index
    %c0_12 = arith.constant 0 : index
    %12 = tpu.strided_load %arg1[%c0_10, %c1_11, %c0_12] {strides = array<i32: 1, 2, 1>} : memref<1x38x10xf32, #tpu.memory_space<vmem>>, vector<1x18x10xf32>
    %13 = vector.shape_cast %12 : vector<1x18x10xf32> to vector<18x10xf32>
    %cst_13 = arith.constant dense<0.000000e+00> : vector<18x4xf32>
    %14 = tpu.matmul %13, %11, %cst_13 {dimension_numbers = #tpu.dot_dimension_numbers<[1], [0], [0], [1], [0, 0, 1, 1], [], []>} : vector<18x10xf32>, vector<10x4xf32>, vector<18x4xf32> -> vector<18x4xf32>
    %15 = arith.addf %6, %14 : vector<18x4xf32>
    %c0_14 = arith.constant 0 : index
    %c2 = arith.constant 2 : index
    %c0_15 = arith.constant 0 : index
    %16 = tpu.strided_load %arg1[%c0_14, %c2, %c0_15] {strides = array<i32: 1, 2, 1>} : memref<1x38x10xf32, #tpu.memory_space<vmem>>, vector<1x18x10xf32>
    %17 = vector.shape_cast %16 : vector<1x18x10xf32> to vector<18x10xf32>
    %cst_16 = arith.constant dense<0.000000e+00> : vector<18x4xf32>
    %18 = tpu.matmul %17, %11, %cst_16 {dimension_numbers = #tpu.dot_dimension_numbers<[1], [0], [0], [1], [0, 0, 1, 1], [], []>} : vector<18x10xf32>, vector<10x4xf32>, vector<18x4xf32> -> vector<18x4xf32>
    %19 = arith.addf %10, %18 : vector<18x4xf32>
    %c20 = arith.constant 20 : index
    %c0_17 = arith.constant 0 : index
    %20 = vector.load %arg2[%c20, %c0_17] : memref<30x4xf32, #tpu.memory_space<vmem>>, vector<10x4xf32>
    %c0_18 = arith.constant 0 : index
    %c2_19 = arith.constant 2 : index
    %c0_20 = arith.constant 0 : index
    %21 = tpu.strided_load %arg1[%c0_18, %c2_19, %c0_20] {strides = array<i32: 1, 2, 1>} : memref<1x38x10xf32, #tpu.memory_space<vmem>>, vector<1x18x10xf32>
    %22 = vector.shape_cast %21 : vector<1x18x10xf32> to vector<18x10xf32>
    %cst_21 = arith.constant dense<0.000000e+00> : vector<18x4xf32>
    %23 = tpu.matmul %22, %20, %cst_21 {dimension_numbers = #tpu.dot_dimension_numbers<[1], [0], [0], [1], [0, 0, 1, 1], [], []>} : vector<18x10xf32>, vector<10x4xf32>, vector<18x4xf32> -> vector<18x4xf32>
    %24 = arith.addf %15, %23 : vector<18x4xf32>
    %c0_22 = arith.constant 0 : index
    %c3 = arith.constant 3 : index
    %c0_23 = arith.constant 0 : index
    %25 = tpu.strided_load %arg1[%c0_22, %c3, %c0_23] {strides = array<i32: 1, 2, 1>} : memref<1x38x10xf32, #tpu.memory_space<vmem>>, vector<1x18x10xf32>
    %26 = vector.shape_cast %25 : vector<1x18x10xf32> to vector<18x10xf32>
    %cst_24 = arith.constant dense<0.000000e+00> : vector<18x4xf32>
    %27 = tpu.matmul %26, %20, %cst_24 {dimension_numbers = #tpu.dot_dimension_numbers<[1], [0], [0], [1], [0, 0, 1, 1], [], []>} : vector<18x10xf32>, vector<10x4xf32>, vector<18x4xf32> -> vector<18x4xf32>
    %28 = arith.addf %19, %27 : vector<18x4xf32>
    %29 = arith.maximumf %24, %28 : vector<18x4xf32>
    %c0_25 = arith.constant 0 : index
    %c0_26 = arith.constant 0 : index
    %30 = vector.load %arg3[%c0_25, %c0_26] : memref<1x4xf32, #tpu.memory_space<vmem>>, vector<1x4xf32>
    %31 = vector.broadcast %30 : vector<1x4xf32> to vector<18x4xf32>
    %32 = arith.addf %29, %31 : vector<18x4xf32>
    %cst_27 = arith.constant 0.000000e+00 : f32
    %33 = vector.broadcast %cst_27 : f32 to vector<18x4xf32>
    %34 = arith.maximumf %32, %33 : vector<18x4xf32>
    %c0_28 = arith.constant 0 : index
    %c0_29 = arith.constant 0 : index
    %35 = vector.load %arg11[%c0_28, %c0_29] : memref<18x4xf32, #tpu.memory_space<vmem>>, vector<18x4xf32>
    tpu.vector_store %arg11[%c0_28, %c0_29], %34 {strides = array<i32>} : memref<18x4xf32, #tpu.memory_space<vmem>>, vector<18x4xf32>,
    %cst_30 = arith.constant 0.000000e+00 : f32
    %36 = vector.broadcast %cst_30 : f32 to vector<8x4xf32>
    %cst_31 = arith.constant 0.000000e+00 : f32
    %37 = vector.broadcast %cst_31 : f32 to vector<8x4xf32>
    %c0_32 = arith.constant 0 : index
    %c0_33 = arith.constant 0 : index
    %38 = vector.load %arg4[%c0_32, %c0_33] : memref<12x4xf32, #tpu.memory_space<vmem>>, vector<4x4xf32>
    %c0_34 = arith.constant 0 : index
    %c0_35 = arith.constant 0 : index
    %39 = tpu.strided_load %arg11[%c0_34, %c0_35] {strides = array<i32: 2, 1>} : memref<18x4xf32, #tpu.memory_space<vmem>>, vector<8x4xf32>
    %cst_36 = arith.constant dense<0.000000e+00> : vector<8x4xf32>
    %40 = tpu.matmul %39, %38, %cst_36 {dimension_numbers = #tpu.dot_dimension_numbers<[1], [0], [0], [1], [0, 0, 1, 1], [], []>} : vector<8x4xf32>, vector<4x4xf32>, vector<8x4xf32> -> vector<8x4xf32>
    %41 = arith.addf %36, %40 : vector<8x4xf32>
    %c1_37 = arith.constant 1 : index
    %c0_38 = arith.constant 0 : index
    %42 = tpu.strided_load %arg11[%c1_37, %c0_38] {strides = array<i32: 2, 1>} : memref<18x4xf32, #tpu.memory_space<vmem>>, vector<8x4xf32>
    %cst_39 = arith.constant dense<0.000000e+00> : vector<8x4xf32>
    %43 = tpu.matmul %42, %38, %cst_39 {dimension_numbers = #tpu.dot_dimension_numbers<[1], [0], [0], [1], [0, 0, 1, 1], [], []>} : vector<8x4xf32>, vector<4x4xf32>, vector<8x4xf32> -> vector<8x4xf32>
    %44 = arith.addf %37, %43 : vector<8x4xf32>
    %c4 = arith.constant 4 : index
    %c0_40 = arith.constant 0 : index
    %45 = vector.load %arg4[%c4, %c0_40] : memref<12x4xf32, #tpu.memory_space<vmem>>, vector<4x4xf32>
    %c1_41 = arith.constant 1 : index
    %c0_42 = arith.constant 0 : index
    %46 = tpu.strided_load %arg11[%c1_41, %c0_42] {strides = array<i32: 2, 1>} : memref<18x4xf32, #tpu.memory_space<vmem>>, vector<8x4xf32>
    %cst_43 = arith.constant dense<0.000000e+00> : vector<8x4xf32>
    %47 = tpu.matmul %46, %45, %cst_43 {dimension_numbers = #tpu.dot_dimension_numbers<[1], [0], [0], [1], [0, 0, 1, 1], [], []>} : vector<8x4xf32>, vector<4x4xf32>, vector<8x4xf32> -> vector<8x4xf32>
    %48 = arith.addf %41, %47 : vector<8x4xf32>
    %c2_44 = arith.constant 2 : index
    %c0_45 = arith.constant 0 : index
    %49 = tpu.strided_load %arg11[%c2_44, %c0_45] {strides = array<i32: 2, 1>} : memref<18x4xf32, #tpu.memory_space<vmem>>, vector<8x4xf32>
    %cst_46 = arith.constant dense<0.000000e+00> : vector<8x4xf32>
    %50 = tpu.matmul %49, %45, %cst_46 {dimension_numbers = #tpu.dot_dimension_numbers<[1], [0], [0], [1], [0, 0, 1, 1], [], []>} : vector<8x4xf32>, vector<4x4xf32>, vector<8x4xf32> -> vector<8x4xf32>
    %51 = arith.addf %44, %50 : vector<8x4xf32>
    %c8 = arith.constant 8 : index
    %c0_47 = arith.constant 0 : index
    %52 = vector.load %arg4[%c8, %c0_47] : memref<12x4xf32, #tpu.memory_space<vmem>>, vector<4x4xf32>
    %c2_48 = arith.constant 2 : index
    %c0_49 = arith.constant 0 : index
    %53 = tpu.strided_load %arg11[%c2_48, %c0_49] {strides = array<i32: 2, 1>} : memref<18x4xf32, #tpu.memory_space<vmem>>, vector<8x4xf32>
    %cst_50 = arith.constant dense<0.000000e+00> : vector<8x4xf32>
    %54 = tpu.matmul %53, %52, %cst_50 {dimension_numbers = #tpu.dot_dimension_numbers<[1], [0], [0], [1], [0, 0, 1, 1], [], []>} : vector<8x4xf32>, vector<4x4xf32>, vector<8x4xf32> -> vector<8x4xf32>
    %55 = arith.addf %48, %54 : vector<8x4xf32>
    %c3_51 = arith.constant 3 : index
    %c0_52 = arith.constant 0 : index
    %56 = tpu.strided_load %arg11[%c3_51, %c0_52] {strides = array<i32: 2, 1>} : memref<18x4xf32, #tpu.memory_space<vmem>>, vector<8x4xf32>
    %cst_53 = arith.constant dense<0.000000e+00> : vector<8x4xf32>
    %57 = tpu.matmul %56, %52, %cst_53 {dimension_numbers = #tpu.dot_dimension_numbers<[1], [0], [0], [1], [0, 0, 1, 1], [], []>} : vector<8x4xf32>, vector<4x4xf32>, vector<8x4xf32> -> vector<8x4xf32>
    %58 = arith.addf %51, %57 : vector<8x4xf32>
    %59 = arith.maximumf %55, %58 : vector<8x4xf32>
    %c0_54 = arith.constant 0 : index
    %c0_55 = arith.constant 0 : index
    %60 = vector.load %arg5[%c0_54, %c0_55] : memref<1x4xf32, #tpu.memory_space<vmem>>, vector<1x4xf32>
    %61 = vector.broadcast %60 : vector<1x4xf32> to vector<8x4xf32>
    %62 = arith.addf %59, %61 : vector<8x4xf32>
    %63 = tpu.transpose %62, [1, 0] : vector<8x4xf32> -> vector<4x8xf32>
    %c0_56 = arith.constant 0 : index
    %c0_57 = arith.constant 0 : index
    %64 = vector.load %arg6[%c0_56, %c0_57] : memref<8x32xf32, #tpu.memory_space<vmem>>, vector<8x32xf32>
    %cst_58 = arith.constant dense<0.000000e+00> : vector<4x32xf32>
    %65 = tpu.matmul %63, %64, %cst_58 {dimension_numbers = #tpu.dot_dimension_numbers<[1], [0], [0], [1], [0, 0, 1, 1], [], []>} : vector<4x8xf32>, vector<8x32xf32>, vector<4x32xf32> -> vector<4x32xf32>
    %c0_59 = arith.constant 0 : index
    %c0_60 = arith.constant 0 : index
    %66 = vector.load %arg7[%c0_59, %c0_60] : memref<1x32xf32, #tpu.memory_space<vmem>>, vector<1x32xf32>
    %67 = vector.broadcast %66 : vector<1x32xf32> to vector<4x32xf32>
    %68 = arith.addf %65, %67 : vector<4x32xf32>
    %cst_61 = arith.constant 0.000000e+00 : f32
    %69 = vector.broadcast %cst_61 : f32 to vector<4x32xf32>
    %70 = arith.maximumf %68, %69 : vector<4x32xf32>
    %c0_62 = arith.constant 0 : index
    %c0_63 = arith.constant 0 : index
    %71 = vector.load %arg8[%c0_62, %c0_63] : memref<32x5xf32, #tpu.memory_space<vmem>>, vector<32x5xf32>
    %cst_64 = arith.constant dense<0.000000e+00> : vector<4x5xf32>
    %72 = tpu.matmul %70, %71, %cst_64 {dimension_numbers = #tpu.dot_dimension_numbers<[1], [0], [0], [1], [0, 0, 1, 1], [], []>} : vector<4x32xf32>, vector<32x5xf32>, vector<4x5xf32> -> vector<4x5xf32>
    %c0_65 = arith.constant 0 : index
    %c0_66 = arith.constant 0 : index
    %73 = vector.load %arg9[%c0_65, %c0_66] : memref<1x5xf32, #tpu.memory_space<vmem>>, vector<1x5xf32>
    %74 = vector.broadcast %73 : vector<1x5xf32> to vector<4x5xf32>
    %75 = arith.addf %72, %74 : vector<4x5xf32>
    %cst_67 = arith.constant dense<0xFF800000> : vector<4xf32>
    %76 = vector.multi_reduction <maximumf>, %75, %cst_67 [1] : vector<4x5xf32> to vector<4xf32>
    %77 = vector.shape_cast %76 : vector<4xf32> to vector<4x1xf32>
    %78 = vector.broadcast %77 : vector<4x1xf32> to vector<4x5xf32>
    %79 = arith.subf %75, %78 : vector<4x5xf32>
    %80 = math.exp %79 : vector<4x5xf32>
    %cst_68 = arith.constant dense<0.000000e+00> : vector<4xf32>
    %81 = vector.multi_reduction <add>, %80, %cst_68 [1] : vector<4x5xf32> to vector<4xf32>
    %82 = vector.shape_cast %81 : vector<4xf32> to vector<4x1xf32>
    %83 = math.log %82 : vector<4x1xf32>
    %84 = arith.addf %83, %77 : vector<4x1xf32>
    %85 = vector.broadcast %84 : vector<4x1xf32> to vector<4x5xf32>
    %86 = arith.subf %75, %85 : vector<4x5xf32>
    %c0_69 = arith.constant 0 : index
    %c0_70 = arith.constant 0 : index
    %c0_71 = arith.constant 0 : index
    %87 = vector.load %arg10[%c0_69, %c0_70, %c0_71] : memref<1x4x5xf32, #tpu.memory_space<vmem>>, vector<1x4x5xf32>
    %88 = vector.shape_cast %87 : vector<1x4x5xf32> to vector<4x5xf32>
    %89 = vector.shape_cast %86 : vector<4x5xf32> to vector<1x4x5xf32>
    tpu.vector_store %arg10[%c0_69, %c0_70, %c0_71], %89 {strides = array<i32>} : memref<1x4x5xf32, #tpu.memory_space<vmem>>, vector<1x4x5xf32>,
    return
  }
  func.func @transform_0(%arg0: i32) -> (i32, i32, i32) {
    %c0_i32 = arith.constant 0 : i32
    %c0_i32_0 = arith.constant 0 : i32
    %c0_i32_1 = arith.constant 0 : i32
    return %arg0, %c0_i32, %c0_i32_0 : i32, i32, i32
  }
  func.func @transform_1(%arg0: i32) -> (i32, i32) {
    %c0_i32 = arith.constant 0 : i32
    %c0_i32_0 = arith.constant 0 : i32
    %c0_i32_1 = arith.constant 0 : i32
    return %c0_i32, %c0_i32_0 : i32, i32
  }
  func.func @transform_2(%arg0: i32) -> (i32, i32) {
    %c0_i32 = arith.constant 0 : i32
    %c0_i32_0 = arith.constant 0 : i32
    %c0_i32_1 = arith.constant 0 : i32
    return %c0_i32, %c0_i32_0 : i32, i32
  }
  func.func @transform_3(%arg0: i32) -> (i32, i32) {
    %c0_i32 = arith.constant 0 : i32
    %c0_i32_0 = arith.constant 0 : i32
    %c0_i32_1 = arith.constant 0 : i32
    return %c0_i32, %c0_i32_0 : i32, i32
  }
  func.func @transform_4(%arg0: i32) -> (i32, i32) {
    %c0_i32 = arith.constant 0 : i32
    %c0_i32_0 = arith.constant 0 : i32
    %c0_i32_1 = arith.constant 0 : i32
    return %c0_i32, %c0_i32_0 : i32, i32
  }
  func.func @transform_5(%arg0: i32) -> (i32, i32) {
    %c0_i32 = arith.constant 0 : i32
    %c0_i32_0 = arith.constant 0 : i32
    %c0_i32_1 = arith.constant 0 : i32
    return %c0_i32, %c0_i32_0 : i32, i32
  }
  func.func @transform_6(%arg0: i32) -> (i32, i32) {
    %c0_i32 = arith.constant 0 : i32
    %c0_i32_0 = arith.constant 0 : i32
    %c0_i32_1 = arith.constant 0 : i32
    return %c0_i32, %c0_i32_0 : i32, i32
  }
  func.func @transform_7(%arg0: i32) -> (i32, i32) {
    %c0_i32 = arith.constant 0 : i32
    %c0_i32_0 = arith.constant 0 : i32
    %c0_i32_1 = arith.constant 0 : i32
    return %c0_i32, %c0_i32_0 : i32, i32
  }
  func.func @transform_8(%arg0: i32) -> (i32, i32) {
    %c0_i32 = arith.constant 0 : i32
    %c0_i32_0 = arith.constant 0 : i32
    %c0_i32_1 = arith.constant 0 : i32
    return %c0_i32, %c0_i32_0 : i32, i32
  }
  func.func @transform_9(%arg0: i32) -> (i32, i32, i32) {
    %c0_i32 = arith.constant 0 : i32
    %c0_i32_0 = arith.constant 0 : i32
    %c0_i32_1 = arith.constant 0 : i32
    return %arg0, %c0_i32, %c0_i32_0 : i32, i32, i32
  }
}

</mosaic_0001>

<llo_original>
// kernel: multiclass_convnet_forward.1
$region0: #{multiclass_convnet_forward.1}
  #allocation0 [shape = 'u32[]', space=smem, size = 0x4, offset = 0x4, fixed_abs, tag = 'smem constant byte address 0x4 - core index']
  #allocation1 [shape = 'u32[72,128]{1,0:T(1,128)}', space=vmem, size = 0x9000, scoped, tag = 'internal scratch']
  #allocation2 [shape = 'f32[18,4]{1,0:T(8,128)}', space=vmem, size = 0x3000, scoped, tag = 'scratch operand']
  %s0 = inlined_call_operand.vmem [shape: f32[2,38,10], index: 0, kind: input, shape index: {}]
  %s1 = inlined_call_operand.vmem [shape: f32[30,4], index: 1, kind: input, shape index: {}]
  %s2 = inlined_call_operand.vmem [shape: f32[1,4], index: 2, kind: input, shape index: {}]
  %s3 = inlined_call_operand.vmem [shape: f32[12,4], index: 3, kind: input, shape index: {}]
  %s4 = inlined_call_operand.vmem [shape: f32[1,4], index: 4, kind: input, shape index: {}]
  %s5 = inlined_call_operand.vmem [shape: f32[8,32], index: 5, kind: input, shape index: {}]
  %s6 = inlined_call_operand.vmem [shape: f32[1,32], index: 6, kind: input, shape index: {}]
  %s7 = inlined_call_operand.vmem [shape: f32[32,5], index: 7, kind: input, shape index: {}]
  %s8 = inlined_call_operand.vmem [shape: f32[1,5], index: 8, kind: input, shape index: {}]
  %s9 = inlined_call_operand.hbm [shape: f32[2,4,5], index: 9, kind: output, shape index: {}]
  %s10 = sld [smem:[#allocation0]]
  $region69: #{multiclass_convnet_forward.1} parent=0
    _
  %s12 = ssub.s32 1, %s10
  %s13 = scalar_select 0, %s12, %s10
  $region1: #{multiclass_convnet_forward.1} parent=0
    #allocation3 [shape = 'u8[4096]{0}', space=vmem, size = 0x1000, scoped, tag = 'output window, operand 0']
    #allocation4 [shape = 's32[2]{0}', space=sflag, size = 0x8, scoped, tag = 'scoped memory for multiclass_convnet_forward.1']
    %14 = vsyncpa [#allocation4], 0
    %s15 = scalar_lea.sflag [#allocation4], 1
    %16 = vsyncpa %s15, 0
    loop: start=0, step=1, limit=4
    $region2: #{multiclass_convnet_forward.1} parent=1 // loop_pre_header
      _
    $region3: #{multiclass_convnet_forward.1} parent=1 // loop_header
      %s18 = sphi 0, %s22
      %p19 = scmp.ge.s32.totalorder %s18, 4
      %s28 = sphi 0, %s30
      %s31 = sphi 0, %s28
      %s32 = sphi 0, %s31
      %s48 = sphi 0, %s32
      %s52 = sphi 0, %s52
      %s54 = sphi 0, %s52
      %s55 = sphi 0, %s54
      %s69 = sphi 0, %s55
      %s73 = sphi 0, %s73
      %s75 = sphi 0, %s73
      %s76 = sphi 0, %s75
      %s90 = sphi 0, %s76
      %s94 = sphi 0, %s94
      %s96 = sphi 0, %s94
      %s97 = sphi 0, %s96
      %s111 = sphi 0, %s97
      %s115 = sphi 0, %s115
      %s117 = sphi 0, %s115
      %s118 = sphi 0, %s117
      %s132 = sphi 0, %s118
      %s136 = sphi 0, %s136
      %s138 = sphi 0, %s136
      %s139 = sphi 0, %s138
      %s153 = sphi 0, %s139
      %s157 = sphi 0, %s157
      %s159 = sphi 0, %s157
      %s160 = sphi 0, %s159
      %s174 = sphi 0, %s160
      %s178 = sphi 0, %s178
      %s180 = sphi 0, %s178
      %s181 = sphi 0, %s180
      %s195 = sphi 0, %s181
      %s199 = sphi 0, %s199
      %s201 = sphi 0, %s199
      %s202 = sphi 0, %s201
      %s216 = sphi 0, %s202
      %s222 = sphi 0, %s224
      %s225 = sphi 0, %s222
      %s226 = sphi 0, %s225
      %s242 = sphi 0, %s226
    $region4: #{multiclass_convnet_forward.1} parent=1 // loop_header_branch
      %21 = sbr.rel (%p19) target = $region8
    $region5: #{multiclass_convnet_forward.1} parent=1 // loop_body
      %s23 = ssub.s32 %s18, 1
      %s24 = ssub.s32 %s18, 2
      %s25 = sadd.s32 %s18, 1
      %s26 = ssub.s32 %s18, %s25
      %p27 = scmp.eq.s32.totalorder %s26, 0
      %s29 = sadd.s32 %s28, 1
      %s30 = scalar_select %p27, %s28, %s29
      %p33 = pneg %p27
      %p34 = scmp.eq.s32.totalorder %s18, 1
      %p35 = por %p33, %p34
      %p36 = scmp.ne.s32.totalorder %s28, %s31
      %p37 = scmp.eq.s32.totalorder %s18, 0
      %p38 = por %p36, %p37
      %p39 = scmp.ne.s32.totalorder %s28, %s31
      %p40 = scmp.eq.s32.totalorder %s23, 1
      %p41 = por %p39, %p40
      %p42 = scmp.ne.s32.totalorder %s31, %s32
      %p43 = scmp.eq.s32.totalorder %s23, 0
      %p44 = por %p42, %p43
      %p45 = scmp.ne.s32.totalorder %s31, %s32
      %p46 = scmp.eq.s32.totalorder %s24, 1
      %p47 = por %p45, %p46
      %p49 = scmp.ne.s32.totalorder %s32, %s48
      %p50 = scmp.eq.s32.totalorder %s24, 0
      %p51 = por %p49, %p50
      %s53 = sadd.s32 %s52, 1
      %p56 = scmp.eq.s32.totalorder %s18, 1
      %p57 = scmp.ne.s32.totalorder %s52, %s54
      %p58 = scmp.eq.s32.totalorder %s18, 0
      %p59 = por %p57, %p58
      %p60 = scmp.ne.s32.totalorder %s52, %s54
      %p61 = scmp.eq.s32.totalorder %s23, 1
      %p62 = por %p60, %p61
      %p63 = scmp.ne.s32.totalorder %s54, %s55
      %p64 = scmp.eq.s32.totalorder %s23, 0
      %p65 = por %p63, %p64
      %p66 = scmp.ne.s32.totalorder %s54, %s55
      %p67 = scmp.eq.s32.totalorder %s24, 1
      %p68 = por %p66, %p67
      %p70 = scmp.ne.s32.totalorder %s55, %s69
      %p71 = scmp.eq.s32.totalorder %s24, 0
      %p72 = por %p70, %p71
      %s74 = sadd.s32 %s73, 1
      %p77 = scmp.eq.s32.totalorder %s18, 1
      %p78 = scmp.ne.s32.totalorder %s73, %s75
      %p79 = scmp.eq.s32.totalorder %s18, 0
      %p80 = por %p78, %p79
      %p81 = scmp.ne.s32.totalorder %s73, %s75
      %p82 = scmp.eq.s32.totalorder %s23, 1
      %p83 = por %p81, %p82
      %p84 = scmp.ne.s32.totalorder %s75, %s76
      %p85 = scmp.eq.s32.totalorder %s23, 0
      %p86 = por %p84, %p85
      %p87 = scmp.ne.s32.totalorder %s75, %s76
      %p88 = scmp.eq.s32.totalorder %s24, 1
      %p89 = por %p87, %p88
      %p91 = scmp.ne.s32.totalorder %s76, %s90
      %p92 = scmp.eq.s32.totalorder %s24, 0
      %p93 = por %p91, %p92
      %s95 = sadd.s32 %s94, 1
      %p98 = scmp.eq.s32.totalorder %s18, 1
      %p99 = scmp.ne.s32.totalorder %s94, %s96
      %p100 = scmp.eq.s32.totalorder %s18, 0
      %p101 = por %p99, %p100
      %p102 = scmp.ne.s32.totalorder %s94, %s96
      %p103 = scmp.eq.s32.totalorder %s23, 1
      %p104 = por %p102, %p103
      %p105 = scmp.ne.s32.totalorder %s96, %s97
      %p106 = scmp.eq.s32.totalorder %s23, 0
      %p107 = por %p105, %p106
      %p108 = scmp.ne.s32.totalorder %s96, %s97
      %p109 = scmp.eq.s32.totalorder %s24, 1
      %p110 = por %p108, %p109
      %p112 = scmp.ne.s32.totalorder %s97, %s111
      %p113 = scmp.eq.s32.totalorder %s24, 0
      %p114 = por %p112, %p113
      %s116 = sadd.s32 %s115, 1
      %p119 = scmp.eq.s32.totalorder %s18, 1
      %p120 = scmp.ne.s32.totalorder %s115, %s117
      %p121 = scmp.eq.s32.totalorder %s18, 0
      %p122 = por %p120, %p121
      %p123 = scmp.ne.s32.totalorder %s115, %s117
      %p124 = scmp.eq.s32.totalorder %s23, 1
      %p125 = por %p123, %p124
      %p126 = scmp.ne.s32.totalorder %s117, %s118
      %p127 = scmp.eq.s32.totalorder %s23, 0
      %p128 = por %p126, %p127
      %p129 = scmp.ne.s32.totalorder %s117, %s118
      %p130 = scmp.eq.s32.totalorder %s24, 1
      %p131 = por %p129, %p130
      %p133 = scmp.ne.s32.totalorder %s118, %s132
      %p134 = scmp.eq.s32.totalorder %s24, 0
      %p135 = por %p133, %p134
      %s137 = sadd.s32 %s136, 1
      %p140 = scmp.eq.s32.totalorder %s18, 1
      %p141 = scmp.ne.s32.totalorder %s136, %s138
      %p142 = scmp.eq.s32.totalorder %s18, 0
      %p143 = por %p141, %p142
      %p144 = scmp.ne.s32.totalorder %s136, %s138
      %p145 = scmp.eq.s32.totalorder %s23, 1
      %p146 = por %p144, %p145
      %p147 = scmp.ne.s32.totalorder %s138, %s139
      %p148 = scmp.eq.s32.totalorder %s23, 0
      %p149 = por %p147, %p148
      %p150 = scmp.ne.s32.totalorder %s138, %s139
      %p151 = scmp.eq.s32.totalorder %s24, 1
      %p152 = por %p150, %p151
      %p154 = scmp.ne.s32.totalorder %s139, %s153
      %p155 = scmp.eq.s32.totalorder %s24, 0
      %p156 = por %p154, %p155
      %s158 = sadd.s32 %s157, 1
      %p161 = scmp.eq.s32.totalorder %s18, 1
      %p162 = scmp.ne.s32.totalorder %s157, %s159
      %p163 = scmp.eq.s32.totalorder %s18, 0
      %p164 = por %p162, %p163
      %p165 = scmp.ne.s32.totalorder %s157, %s159
      %p166 = scmp.eq.s32.totalorder %s23, 1
      %p167 = por %p165, %p166
      %p168 = scmp.ne.s32.totalorder %s159, %s160
      %p169 = scmp.eq.s32.totalorder %s23, 0
      %p170 = por %p168, %p169
      %p171 = scmp.ne.s32.totalorder %s159, %s160
      %p172 = scmp.eq.s32.totalorder %s24, 1
      %p173 = por %p171, %p172
      %p175 = scmp.ne.s32.totalorder %s160, %s174
      %p176 = scmp.eq.s32.totalorder %s24, 0
      %p177 = por %p175, %p176
      %s179 = sadd.s32 %s178, 1
      %p182 = scmp.eq.s32.totalorder %s18, 1
      %p183 = scmp.ne.s32.totalorder %s178, %s180
      %p184 = scmp.eq.s32.totalorder %s18, 0
      %p185 = por %p183, %p184
      %p186 = scmp.ne.s32.totalorder %s178, %s180
      %p187 = scmp.eq.s32.totalorder %s23, 1
      %p188 = por %p186, %p187
      %p189 = scmp.ne.s32.totalorder %s180, %s181
      %p190 = scmp.eq.s32.totalorder %s23, 0
      %p191 = por %p189, %p190
      %p192 = scmp.ne.s32.totalorder %s180, %s181
      %p193 = scmp.eq.s32.totalorder %s24, 1
      %p194 = por %p192, %p193
      %p196 = scmp.ne.s32.totalorder %s181, %s195
      %p197 = scmp.eq.s32.totalorder %s24, 0
      %p198 = por %p196, %p197
      %s200 = sadd.s32 %s199, 1
      %p203 = scmp.eq.s32.totalorder %s18, 1
      %p204 = scmp.ne.s32.totalorder %s199, %s201
      %p205 = scmp.eq.s32.totalorder %s18, 0
      %p206 = por %p204, %p205
      %p207 = scmp.ne.s32.totalorder %s199, %s201
      %p208 = scmp.eq.s32.totalorder %s23, 1
      %p209 = por %p207, %p208
      %p210 = scmp.ne.s32.totalorder %s201, %s202
      %p211 = scmp.eq.s32.totalorder %s23, 0
      %p212 = por %p210, %p211
      %p213 = scmp.ne.s32.totalorder %s201, %s202
      %p214 = scmp.eq.s32.totalorder %s24, 1
      %p215 = por %p213, %p214
      %p217 = scmp.ne.s32.totalorder %s202, %s216
      %p218 = scmp.eq.s32.totalorder %s24, 0
      %p219 = por %p217, %p218
      %s220 = ssub.s32 %s18, %s25
      %p221 = scmp.eq.s32.totalorder %s220, 0
      %s223 = sadd.s32 %s222, 1
      %s224 = scalar_select %p221, %s222, %s223
      %p227 = pneg %p221
      %p228 = scmp.eq.s32.totalorder %s18, 1
      %p229 = por %p227, %p228
      %p230 = scmp.ne.s32.totalorder %s222, %s225
      %p231 = scmp.eq.s32.totalorder %s18, 0
      %p232 = por %p230, %p231
      %p233 = scmp.ne.s32.totalorder %s222, %s225
      %p234 = scmp.eq.s32.totalorder %s23, 1
      %p235 = por %p233, %p234
      %p236 = scmp.ne.s32.totalorder %s225, %s226
      %p237 = scmp.eq.s32.totalorder %s23, 0
      %p238 = por %p236, %p237
      %p239 = scmp.ne.s32.totalorder %s225, %s226
      %p240 = scmp.eq.s32.totalorder %s24, 1
      %p241 = por %p239, %p240
      %p243 = scmp.ne.s32.totalorder %s226, %s242
      %p244 = scmp.eq.s32.totalorder %s24, 0
      %p245 = por %p243, %p244
      %p246 = scmp.le.s32.totalorder 1, %s18
      %p247 = scmp.lt.s32.totalorder %s18, 3
      %p248 = pnand %p246, %p247
      %p249 = pneg %p248
      // Predicated region
      $region9: #{multiclass_convnet_forward.1} parent=5 // pred_check
        _
      $region10: #{multiclass_convnet_forward.1} parent=5 // pred_check_branch
        %251 = sbr.rel (%p248) target = $region12
      $region11: #{multiclass_convnet_forward.1} parent=5 // pred_region
        %s252 = ssub.s32 %s18, 1
        // Predicated region
        $region13: #{multiclass_convnet_forward.1} parent=11 // pred_check
          %p253 = pneg %p65
        $region14: #{multiclass_convnet_forward.1} parent=11 // pred_check_branch
          %255 = sbr.rel (%p253) target = $region16
        $region15: #{multiclass_convnet_forward.1} parent=11 // pred_region
          _
        $region16: #{multiclass_convnet_forward.1} parent=11 // pred_fallthru
          _
        // Predicated region
        $region17: #{multiclass_convnet_forward.1} parent=11 // pred_check
          %p256 = pneg %p86
        $region18: #{multiclass_convnet_forward.1} parent=11 // pred_check_branch
          %258 = sbr.rel (%p256) target = $region20
        $region19: #{multiclass_convnet_forward.1} parent=11 // pred_region
          _
        $region20: #{multiclass_convnet_forward.1} parent=11 // pred_fallthru
          _
        // Predicated region
        $region21: #{multiclass_convnet_forward.1} parent=11 // pred_check
          %p259 = pneg %p107
        $region22: #{multiclass_convnet_forward.1} parent=11 // pred_check_branch
          %261 = sbr.rel (%p259) target = $region24
        $region23: #{multiclass_convnet_forward.1} parent=11 // pred_region
          _
        $region24: #{multiclass_convnet_forward.1} parent=11 // pred_fallthru
          _
        // Predicated region
        $region25: #{multiclass_convnet_forward.1} parent=11 // pred_check
          %p262 = pneg %p128
        $region26: #{multiclass_convnet_forward.1} parent=11 // pred_check_branch
          %264 = sbr.rel (%p262) target = $region28
        $region27: #{multiclass_convnet_forward.1} parent=11 // pred_region
          _
        $region28: #{multiclass_convnet_forward.1} parent=11 // pred_fallthru
          _
        // Predicated region
        $region29: #{multiclass_convnet_forward.1} parent=11 // pred_check
          %p265 = pneg %p149
        $region30: #{multiclass_convnet_forward.1} parent=11 // pred_check_branch
          %267 = sbr.rel (%p265) target = $region32
        $region31: #{multiclass_convnet_forward.1} parent=11 // pred_region
          _
        $region32: #{multiclass_convnet_forward.1} parent=11 // pred_fallthru
          _
        // Predicated region
        $region33: #{multiclass_convnet_forward.1} parent=11 // pred_check
          %p268 = pneg %p170
        $region34: #{multiclass_convnet_forward.1} parent=11 // pred_check_branch
          %270 = sbr.rel (%p268) target = $region36
        $region35: #{multiclass_convnet_forward.1} parent=11 // pred_region
          _
        $region36: #{multiclass_convnet_forward.1} parent=11 // pred_fallthru
          _
        // Predicated region
        $region37: #{multiclass_convnet_forward.1} parent=11 // pred_check
          %p271 = pneg %p191
        $region38: #{multiclass_convnet_forward.1} parent=11 // pred_check_branch
          %273 = sbr.rel (%p271) target = $region40
        $region39: #{multiclass_convnet_forward.1} parent=11 // pred_region
          _
        $region40: #{multiclass_convnet_forward.1} parent=11 // pred_fallthru
          _
        // Predicated region
        $region41: #{multiclass_convnet_forward.1} parent=11 // pred_check
          %p274 = pneg %p212
        $region42: #{multiclass_convnet_forward.1} parent=11 // pred_check_branch
          %276 = sbr.rel (%p274) target = $region44
        $region43: #{multiclass_convnet_forward.1} parent=11 // pred_region
          _
        $region44: #{multiclass_convnet_forward.1} parent=11 // pred_fallthru
          _
      $region12: #{multiclass_convnet_forward.1} parent=5 // pred_fallthru
        _
      %p277 = scmp.lt.s32.totalorder %s18, 2
      // Predicated region
      $region45: #{multiclass_convnet_forward.1} parent=5 // pred_check
        %p278 = pneg %p277
      $region46: #{multiclass_convnet_forward.1} parent=5 // pred_check_branch
        %280 = sbr.rel (%p278) target = $region48
      $region47: #{multiclass_convnet_forward.1} parent=5 // pred_region
        // Predicated region
        $region49: #{multiclass_convnet_forward.1} parent=47 // pred_check
          %p281 = pneg %p38
        $region50: #{multiclass_convnet_forward.1} parent=47 // pred_check_branch
          %283 = sbr.rel (%p281) target = $region52
        $region51: #{multiclass_convnet_forward.1} parent=47 // pred_region
          %p284 = scmp.lt.s32.totalorder %s18, 1
          %s285 = scalar_select %p284, %s18, 1
          %s286 = smul.addr %s285, 5
          %s287 = smul.addr %s286, 8
          %s288 = scalar_lea.vmem %s0, %s287
        $region52: #{multiclass_convnet_forward.1} parent=47 // pred_fallthru
          _
      $region48: #{multiclass_convnet_forward.1} parent=5 // pred_fallthru
        _
      %p289 = scmp.le.s32.totalorder 1, %s18
      %p290 = scmp.lt.s32.totalorder %s18, 3
      %p291 = pnand %p289, %p290
      %p292 = pneg %p291
      // Predicated region
      $region53: #{multiclass_convnet_forward.1} parent=5 // pred_check
        _
      $region54: #{multiclass_convnet_forward.1} parent=5 // pred_check_branch
        %294 = sbr.rel (%p291) target = $region56
      $region55: #{multiclass_convnet_forward.1} parent=5 // pred_region
        %s295 = ssub.s32 %s18, 1
        %p296 = scmp.lt.s32.totalorder %s23, 1
        %s297 = scalar_select %p296, %s23, 1
        %s298 = smul.addr %s297, 5
        %s299 = smul.addr %s298, 8
        %s300 = scalar_lea.vmem %s0, %s299
        %p301 = pneg %p44
        %p302 = pneg %p41
        %p303 = pneg %p65
        %p304 = pneg %p62
        %p305 = pneg %p86
        %p306 = pneg %p83
        %p307 = pneg %p107
        %p308 = pneg %p104
        %p309 = pneg %p128
        %p310 = pneg %p125
        %p311 = pneg %p149
        %p312 = pneg %p146
        %p313 = pneg %p170
        %p314 = pneg %p167
        %p315 = pneg %p191
        %p316 = pneg %p188
        %p317 = pneg %p212
        %p318 = pneg %p209
        %p319 = pneg %p238
        %p320 = pneg %p235
        %s321 = sand.u32 %s225, 1
        %s322 = scalar_lea.sflag [#allocation4], %s321
        %s323 = sand.u32 %s225, 1
        %s324 = smul.addr %s323, 4
        %s325 = scalar_lea.vmem [#allocation3], %s324
        %p326 = scmp.lt.s32.totalorder %s23, 1
        %s327 = scalar_select %p326, %s23, 1
        %s328 = smul.addr %s327, 5
        %s329 = smul.addr %s328, 8
        %s330 = scalar_lea.vmem %s0, %s329
        %v331 = vld [vmem:[%s1] sm:$0xff]
        %v332 = vld [vmem:[%s1 + $0x8] sm:$0x3]
        %v333 = vld [vmem:[%s330] ss:$2 sm:$0xff]
        %s334 = scalar_lea.vmem %s330, 16
        %v335 = vld [vmem:[%s334] ss:$2 sm:$0xff]
        %s336 = scalar_lea.vmem %s330, 32
        %v337 = vld [vmem:[%s336] ss:$2 sm:$0x3]
        %s338 = scalar_lea.vmem %s330, 1
        %v339 = vld [vmem:[%s338] ss:$2 sm:$0xff]
        %s340 = scalar_lea.vmem %s330, 17
        %v341 = vld [vmem:[%s340] ss:$2 sm:$0xff]
        %s342 = scalar_lea.vmem %s330, 33
        %v343 = vld [vmem:[%s342] ss:$2 sm:$0x3]
        %v344 = vld [vmem:[%s1 + $0xa] sm:$0xff]
        %v345 = vld [vmem:[%s1 + $0x12] sm:$0x3]
        %vm346 = vcmask 80896
        %v348 = vsel %vm346, %v339, 0
        %v351 = vsel %vm346, %v341, 0
        %v354 = vsel %vm346, %v343, 0
        %vm356 = vcmask 1041408
        %v358 = vsel %vm356, %v345, 0
        %360 = vmatpush.msra.mxu0 0.0
        %361 = vmatpush.msra.mxu0 0.0
        %362 = vmatpush.msra.mxu0 0.0
        %363 = vmatpush.msra.mxu0 0.0
        %364 = vmatpush.msra.mxu0 0.0
        %365 = vmatpush.msra.mxu0 0.0
        %366 = vmatpush.msra.mxu0 0.0
        %367 = vmatpush.msra.mxu0 0.0
        %368 = vmatpush.msra.mxu0 0.0
        %369 = vmatpush.msra.mxu0 0.0
        %370 = vmatpush.msra.mxu0 0.0
        %371 = vmatpush.msra.mxu0 0.0
        %372 = vmatpush.msra.mxu0 0.0
        %373 = vmatpush.msra.mxu0 0.0
        %374 = vmatpush.msra.mxu0 %v358
        %375 = vmatpush.msra.mxu0 %v344
        %376 = vmatmul.f32.gmra.mxu0 %v348
        %v377 = vpop.f32.mrf.mxu0
        %v378 = vadd.f32 0.0, %v377
        %379 = vmatmul.f32.gmra.mxu0 %v351
        %v380 = vpop.f32.mrf.mxu0
        %v381 = vadd.f32 0.0, %v380
        %382 = vmatmul.f32.gmra.mxu0 %v354
        %v383 = vpop.f32.mrf.mxu0
        %v384 = vadd.f32 0.0, %v383
        %385 = vdwg.mxu0
        %v387 = vsel %vm346, %v333, 0
        %v390 = vsel %vm346, %v335, 0
        %v393 = vsel %vm346, %v337, 0
        %v396 = vsel %vm356, %v332, 0
        %398 = vmatpush.msra.mxu0 0.0
        %399 = vmatpush.msra.mxu0 0.0
        %400 = vmatpush.msra.mxu0 0.0
        %401 = vmatpush.msra.mxu0 0.0
        %402 = vmatpush.msra.mxu0 0.0
        %403 = vmatpush.msra.mxu0 0.0
        %404 = vmatpush.msra.mxu0 0.0
        %405 = vmatpush.msra.mxu0 0.0
        %406 = vmatpush.msra.mxu0 0.0
        %407 = vmatpush.msra.mxu0 0.0
        %408 = vmatpush.msra.mxu0 0.0
        %409 = vmatpush.msra.mxu0 0.0
        %410 = vmatpush.msra.mxu0 0.0
        %411 = vmatpush.msra.mxu0 0.0
        %412 = vmatpush.msra.mxu0 %v396
        %413 = vmatpush.msra.mxu0 %v331
        %414 = vmatmul.f32.gmra.mxu0 %v387
        %v415 = vpop.f32.mrf.mxu0
        %v416 = vadd.f32 %v378, %v415
        %417 = vmatmul.f32.gmra.mxu0 %v390
        %v418 = vpop.f32.mrf.mxu0
        %v419 = vadd.f32 %v381, %v418
        %420 = vmatmul.f32.gmra.mxu0 %v393
        %v421 = vpop.f32.mrf.mxu0
        %v422 = vadd.f32 %v384, %v421
        %423 = vdwg.mxu0
        %s424 = scalar_lea.vmem %s330, 2
        %v425 = vld [vmem:[%s424] ss:$2 sm:$0xff]
        %s426 = scalar_lea.vmem %s330, 18
        %v427 = vld [vmem:[%s426] ss:$2 sm:$0xff]
        %s428 = scalar_lea.vmem %s330, 34
        %v429 = vld [vmem:[%s428] ss:$2 sm:$0x3]
        %v431 = vsel %vm346, %v425, 0
        %v434 = vsel %vm346, %v427, 0
        %v437 = vsel %vm346, %v429, 0
        %439 = vmatpush.msra.mxu0 0.0
        %440 = vmatpush.msra.mxu0 0.0
        %441 = vmatpush.msra.mxu0 0.0
        %442 = vmatpush.msra.mxu0 0.0
        %443 = vmatpush.msra.mxu0 0.0
        %444 = vmatpush.msra.mxu0 0.0
        %445 = vmatpush.msra.mxu0 0.0
        %446 = vmatpush.msra.mxu0 0.0
        %447 = vmatpush.msra.mxu0 0.0
        %448 = vmatpush.msra.mxu0 0.0
        %449 = vmatpush.msra.mxu0 0.0
        %450 = vmatpush.msra.mxu0 0.0
        %451 = vmatpush.msra.mxu0 0.0
        %452 = vmatpush.msra.mxu0 0.0
        %453 = vmatpush.msra.mxu0 %v358
        %454 = vmatpush.msra.mxu0 %v344
        %455 = vmatmul.f32.gmra.mxu0 %v431
        %v456 = vpop.f32.mrf.mxu0
        %v457 = vadd.f32 0.0, %v456
        %458 = vmatmul.f32.gmra.mxu0 %v434
        %v459 = vpop.f32.mrf.mxu0
        %v460 = vadd.f32 0.0, %v459
        %461 = vmatmul.f32.gmra.mxu0 %v437
        %v462 = vpop.f32.mrf.mxu0
        %v463 = vadd.f32 0.0, %v462
        %464 = vdwg.mxu0
        %465 = vmatpush.msra.mxu0 0.0
        %466 = vmatpush.msra.mxu0 0.0
        %467 = vmatpush.msra.mxu0 0.0
        %468 = vmatpush.msra.mxu0 0.0
        %469 = vmatpush.msra.mxu0 0.0
        %470 = vmatpush.msra.mxu0 0.0
        %471 = vmatpush.msra.mxu0 0.0
        %472 = vmatpush.msra.mxu0 0.0
        %473 = vmatpush.msra.mxu0 0.0
        %474 = vmatpush.msra.mxu0 0.0
        %475 = vmatpush.msra.mxu0 0.0
        %476 = vmatpush.msra.mxu0 0.0
        %477 = vmatpush.msra.mxu0 0.0
        %478 = vmatpush.msra.mxu0 0.0
        %479 = vmatpush.msra.mxu0 %v396
        %480 = vmatpush.msra.mxu0 %v331
        %481 = vmatmul.f32.gmra.mxu0 %v348
        %v482 = vpop.f32.mrf.mxu0
        %v483 = vadd.f32 %v457, %v482
        %484 = vmatmul.f32.gmra.mxu0 %v351
        %v485 = vpop.f32.mrf.mxu0
        %v486 = vadd.f32 %v460, %v485
        %487 = vmatmul.f32.gmra.mxu0 %v354
        %v488 = vpop.f32.mrf.mxu0
        %v489 = vadd.f32 %v463, %v488
        %490 = vdwg.mxu0
        %v491 = vld [vmem:[%s1 + $0x14] sm:$0xff]
        %v492 = vld [vmem:[%s1 + $0x1c] sm:$0x3]
        %v494 = vsel %vm356, %v492, 0
        %496 = vmatpush.msra.mxu0 0.0
        %497 = vmatpush.msra.mxu0 0.0
        %498 = vmatpush.msra.mxu0 0.0
        %499 = vmatpush.msra.mxu0 0.0
        %500 = vmatpush.msra.mxu0 0.0
        %501 = vmatpush.msra.mxu0 0.0
        %502 = vmatpush.msra.mxu0 0.0
        %503 = vmatpush.msra.mxu0 0.0
        %504 = vmatpush.msra.mxu0 0.0
        %505 = vmatpush.msra.mxu0 0.0
        %506 = vmatpush.msra.mxu0 0.0
        %507 = vmatpush.msra.mxu0 0.0
        %508 = vmatpush.msra.mxu0 0.0
        %509 = vmatpush.msra.mxu0 0.0
        %510 = vmatpush.msra.mxu0 %v494
        %511 = vmatpush.msra.mxu0 %v491
        %512 = vmatmul.f32.gmra.mxu0 %v431
        %v513 = vpop.f32.mrf.mxu0
        %v514 = vadd.f32 0.0, %v513
        %515 = vmatmul.f32.gmra.mxu0 %v434
        %v516 = vpop.f32.mrf.mxu0
        %v517 = vadd.f32 0.0, %v516
        %518 = vmatmul.f32.gmra.mxu0 %v437
        %v519 = vpop.f32.mrf.mxu0
        %v520 = vadd.f32 0.0, %v519
        %521 = vdwg.mxu0
        %v522 = vadd.f32 %v416, %v514
        %v523 = vadd.f32 %v419, %v517
        %v524 = vadd.f32 %v422, %v520
        %s525 = scalar_lea.vmem %s330, 3
        %v526 = vld [vmem:[%s525] ss:$2 sm:$0xff]
        %s527 = scalar_lea.vmem %s330, 19
        %v528 = vld [vmem:[%s527] ss:$2 sm:$0xff]
        %s529 = scalar_lea.vmem %s330, 35
        %v530 = vld [vmem:[%s529] ss:$2 sm:$0x3]
        %v532 = vsel %vm346, %v526, 0
        %v535 = vsel %vm346, %v528, 0
        %v538 = vsel %vm346, %v530, 0
        %540 = vmatpush.msra.mxu0 0.0
        %541 = vmatpush.msra.mxu0 0.0
        %542 = vmatpush.msra.mxu0 0.0
        %543 = vmatpush.msra.mxu0 0.0
        %544 = vmatpush.msra.mxu0 0.0
        %545 = vmatpush.msra.mxu0 0.0
        %546 = vmatpush.msra.mxu0 0.0
        %547 = vmatpush.msra.mxu0 0.0
        %548 = vmatpush.msra.mxu0 0.0
        %549 = vmatpush.msra.mxu0 0.0
        %550 = vmatpush.msra.mxu0 0.0
        %551 = vmatpush.msra.mxu0 0.0
        %552 = vmatpush.msra.mxu0 0.0
        %553 = vmatpush.msra.mxu0 0.0
        %554 = vmatpush.msra.mxu0 %v494
        %555 = vmatpush.msra.mxu0 %v491
        %556 = vmatmul.f32.gmra.mxu0 %v532
        %v557 = vpop.f32.mrf.mxu0
        %v558 = vadd.f32 0.0, %v557
        %559 = vmatmul.f32.gmra.mxu0 %v535
        %v560 = vpop.f32.mrf.mxu0
        %v561 = vadd.f32 0.0, %v560
        %562 = vmatmul.f32.gmra.mxu0 %v538
        %v563 = vpop.f32.mrf.mxu0
        %v564 = vadd.f32 0.0, %v563
        %565 = vdwg.mxu0
        %v566 = vadd.f32 %v483, %v558
        %v567 = vadd.f32 %v486, %v561
        %v568 = vadd.f32 %v489, %v564
        %v569 = vmax.f32 %v522, %v566
        %v570 = vmax.f32 %v523, %v567
        %v571 = vmax.f32 %v524, %v568
        %v572 = vld [vmem:[%s2] sm:$0x1]
        %v574 = vperm.slane %v572, 0
        %v576 = vadd.f32 %v569, %v574
        %v577 = vadd.f32 %v570, %v574
        %v578 = vadd.f32 %v571, %v574
        %v579 = vmax.f32 %v576, 0.0
        %v580 = vmax.f32 %v577, 0.0
        %v581 = vmax.f32 %v578, 0.0
        %vm582 = vcmask 31744
        %583 = vst.msk [vmem:[#allocation2] sm:$0xff] %vm582, %v579
        %584 = vst.msk [vmem:[#allocation2 + $0x8] sm:$0xff] %vm582, %v580
        %vm585 = vcmask 25600
        %586 = vst.msk [vmem:[#allocation2 + $0x10] sm:$0x3] %vm585, %v581
        %v587 = vld [vmem:[%s3] sm:$0xf]
        %v588 = vld [vmem:[#allocation2] ss:$2 sm:$0xff]
        %s589 = scalar_lea.vmem [#allocation2], 1
        %v590 = vld [vmem:[%s589] ss:$2 sm:$0xff]
        %v591 = vld [vmem:[%s3 + $0x4] sm:$0xf]
        %v593 = vsel %vm582, %v590, 0
        %vm595 = vcmask 1043456
        %v597 = vsel %vm595, %v591, 0
        %599 = vmatpush.msra.mxu0 0.0
        %600 = vmatpush.msra.mxu0 0.0
        %601 = vmatpush.msra.mxu0 0.0
        %602 = vmatpush.msra.mxu0 0.0
        %603 = vmatpush.msra.mxu0 0.0
        %604 = vmatpush.msra.mxu0 0.0
        %605 = vmatpush.msra.mxu0 0.0
        %606 = vmatpush.msra.mxu0 0.0
        %607 = vmatpush.msra.mxu0 0.0
        %608 = vmatpush.msra.mxu0 0.0
        %609 = vmatpush.msra.mxu0 0.0
        %610 = vmatpush.msra.mxu0 0.0
        %611 = vmatpush.msra.mxu0 0.0
        %612 = vmatpush.msra.mxu0 0.0
        %613 = vmatpush.msra.mxu0 0.0
        %614 = vmatpush.msra.mxu0 %v597
        %615 = vmatmul.f32.gmra.mxu0 %v593
        %v616 = vpop.f32.mrf.mxu0
        %v617 = vadd.f32 0.0, %v616
        %618 = vdwg.mxu0
        %v620 = vsel %vm582, %v588, 0
        %v623 = vsel %vm595, %v587, 0
        %625 = vmatpush.msra.mxu0 0.0
        %626 = vmatpush.msra.mxu0 0.0
        %627 = vmatpush.msra.mxu0 0.0
        %628 = vmatpush.msra.mxu0 0.0
        %629 = vmatpush.msra.mxu0 0.0
        %630 = vmatpush.msra.mxu0 0.0
        %631 = vmatpush.msra.mxu0 0.0
        %632 = vmatpush.msra.mxu0 0.0
        %633 = vmatpush.msra.mxu0 0.0
        %634 = vmatpush.msra.mxu0 0.0
        %635 = vmatpush.msra.mxu0 0.0
        %636 = vmatpush.msra.mxu0 0.0
        %637 = vmatpush.msra.mxu0 0.0
        %638 = vmatpush.msra.mxu0 0.0
        %639 = vmatpush.msra.mxu0 0.0
        %640 = vmatpush.msra.mxu0 %v623
        %641 = vmatmul.f32.gmra.mxu0 %v620
        %v642 = vpop.f32.mrf.mxu0
        %v643 = vadd.f32 %v617, %v642
        %644 = vdwg.mxu0
        %s645 = scalar_lea.vmem [#allocation2], 2
        %v646 = vld [vmem:[%s645] ss:$2 sm:$0xff]
        %v648 = vsel %vm582, %v646, 0
        %650 = vmatpush.msra.mxu0 0.0
        %651 = vmatpush.msra.mxu0 0.0
        %652 = vmatpush.msra.mxu0 0.0
        %653 = vmatpush.msra.mxu0 0.0
        %654 = vmatpush.msra.mxu0 0.0
        %655 = vmatpush.msra.mxu0 0.0
        %656 = vmatpush.msra.mxu0 0.0
        %657 = vmatpush.msra.mxu0 0.0
        %658 = vmatpush.msra.mxu0 0.0
        %659 = vmatpush.msra.mxu0 0.0
        %660 = vmatpush.msra.mxu0 0.0
        %661 = vmatpush.msra.mxu0 0.0
        %662 = vmatpush.msra.mxu0 0.0
        %663 = vmatpush.msra.mxu0 0.0
        %664 = vmatpush.msra.mxu0 0.0
        %665 = vmatpush.msra.mxu0 %v597
        %666 = vmatmul.f32.gmra.mxu0 %v648
        %v667 = vpop.f32.mrf.mxu0
        %v668 = vadd.f32 0.0, %v667
        %669 = vdwg.mxu0
        %670 = vmatpush.msra.mxu0 0.0
        %671 = vmatpush.msra.mxu0 0.0
        %672 = vmatpush.msra.mxu0 0.0
        %673 = vmatpush.msra.mxu0 0.0
        %674 = vmatpush.msra.mxu0 0.0
        %675 = vmatpush.msra.mxu0 0.0
        %676 = vmatpush.msra.mxu0 0.0
        %677 = vmatpush.msra.mxu0 0.0
        %678 = vmatpush.msra.mxu0 0.0
        %679 = vmatpush.msra.mxu0 0.0
        %680 = vmatpush.msra.mxu0 0.0
        %681 = vmatpush.msra.mxu0 0.0
        %682 = vmatpush.msra.mxu0 0.0
        %683 = vmatpush.msra.mxu0 0.0
        %684 = vmatpush.msra.mxu0 0.0
        %685 = vmatpush.msra.mxu0 %v623
        %686 = vmatmul.f32.gmra.mxu0 %v593
        %v687 = vpop.f32.mrf.mxu0
        %v688 = vadd.f32 %v668, %v687
        %689 = vdwg.mxu0
        %v690 = vld [vmem:[%s3 + $0x8] sm:$0xf]
        %v692 = vsel %vm595, %v690, 0
        %694 = vmatpush.msra.mxu0 0.0
        %695 = vmatpush.msra.mxu0 0.0
        %696 = vmatpush.msra.mxu0 0.0
        %697 = vmatpush.msra.mxu0 0.0
        %698 = vmatpush.msra.mxu0 0.0
        %699 = vmatpush.msra.mxu0 0.0
        %700 = vmatpush.msra.mxu0 0.0
        %701 = vmatpush.msra.mxu0 0.0
        %702 = vmatpush.msra.mxu0 0.0
        %703 = vmatpush.msra.mxu0 0.0
        %704 = vmatpush.msra.mxu0 0.0
        %705 = vmatpush.msra.mxu0 0.0
        %706 = vmatpush.msra.mxu0 0.0
        %707 = vmatpush.msra.mxu0 0.0
        %708 = vmatpush.msra.mxu0 0.0
        %709 = vmatpush.msra.mxu0 %v692
        %710 = vmatmul.f32.gmra.mxu0 %v648
        %v711 = vpop.f32.mrf.mxu0
        %v712 = vadd.f32 0.0, %v711
        %713 = vdwg.mxu0
        %v714 = vadd.f32 %v643, %v712
        %s715 = scalar_lea.vmem [#allocation2], 3
        %v716 = vld [vmem:[%s715] ss:$2 sm:$0xff]
        %v718 = vsel %vm582, %v716, 0
        %720 = vmatpush.msra.mxu0 0.0
        %721 = vmatpush.msra.mxu0 0.0
        %722 = vmatpush.msra.mxu0 0.0
        %723 = vmatpush.msra.mxu0 0.0
        %724 = vmatpush.msra.mxu0 0.0
        %725 = vmatpush.msra.mxu0 0.0
        %726 = vmatpush.msra.mxu0 0.0
        %727 = vmatpush.msra.mxu0 0.0
        %728 = vmatpush.msra.mxu0 0.0
        %729 = vmatpush.msra.mxu0 0.0
        %730 = vmatpush.msra.mxu0 0.0
        %731 = vmatpush.msra.mxu0 0.0
        %732 = vmatpush.msra.mxu0 0.0
        %733 = vmatpush.msra.mxu0 0.0
        %734 = vmatpush.msra.mxu0 0.0
        %735 = vmatpush.msra.mxu0 %v692
        %736 = vmatmul.f32.gmra.mxu0 %v718
        %v737 = vpop.f32.mrf.mxu0
        %v738 = vadd.f32 0.0, %v737
        %739 = vdwg.mxu0
        %v740 = vadd.f32 %v688, %v738
        %v741 = vmax.f32 %v714, %v740
        %v742 = vld [vmem:[%s4] sm:$0x1]
        %v744 = vperm.slane %v742, 0
        %v746 = vadd.f32 %v741, %v744
        %747 = vxpose.xlu0.b32.start [1/16] %v746, 128
        %748 = vxpose.xlu0.b32.cont [2/16] 0.0, 128
        %749 = vxpose.xlu0.b32.cont [3/16] 0.0, 128
        %750 = vxpose.xlu0.b32.cont [4/16] 0.0, 128
        %751 = vxpose.xlu0.b32.cont [5/16] 0.0, 128
        %752 = vxpose.xlu0.b32.cont [6/16] 0.0, 128
        %753 = vxpose.xlu0.b32.cont [7/16] 0.0, 128
        %754 = vxpose.xlu0.b32.cont [8/16] 0.0, 128
        %755 = vxpose.xlu0.b32.cont [9/16] 0.0, 128
        %756 = vxpose.xlu0.b32.cont [10/16] 0.0, 128
        %757 = vxpose.xlu0.b32.cont [11/16] 0.0, 128
        %758 = vxpose.xlu0.b32.cont [12/16] 0.0, 128
        %759 = vxpose.xlu0.b32.cont [13/16] 0.0, 128
        %760 = vxpose.xlu0.b32.cont [14/16] 0.0, 128
        %761 = vxpose.xlu0.b32.cont [15/16] 0.0, 128
        %762 = vxpose.xlu0.b32.end [16/16] 0.0, 128
        %v763 = vpop.trf.xlu0
        %v764 = vpop.trf.xlu0
        %v765 = vpop.trf.xlu0
        %v766 = vpop.trf.xlu0
        %v767 = vpop.trf.xlu0
        %v768 = vpop.trf.xlu0
        %v769 = vpop.trf.xlu0
        %v770 = vpop.trf.xlu0
        %v771 = vpop.trf.xlu0
        %v772 = vpop.trf.xlu0
        %v773 = vpop.trf.xlu0
        %v774 = vpop.trf.xlu0
        %v775 = vpop.trf.xlu0
        %v776 = vpop.trf.xlu0
        %v777 = vpop.trf.xlu0
        %v778 = vpop.trf.xlu0
        %v779 = vld [vmem:[%s5] sm:$0xff]
        %v780 = vld [vmem:[%s6] sm:$0x1]
        %v782 = vperm.slane %v780, 0
        %vm784 = vcmask 64512
        %v786 = vsel %vm784, %v763, 0
        %788 = vmatpush.msra.mxu0 0.0
        %789 = vmatpush.msra.mxu0 0.0
        %790 = vmatpush.msra.mxu0 0.0
        %791 = vmatpush.msra.mxu0 0.0
        %792 = vmatpush.msra.mxu0 0.0
        %793 = vmatpush.msra.mxu0 0.0
        %794 = vmatpush.msra.mxu0 0.0
        %795 = vmatpush.msra.mxu0 0.0
        %796 = vmatpush.msra.mxu0 0.0
        %797 = vmatpush.msra.mxu0 0.0
        %798 = vmatpush.msra.mxu0 0.0
        %799 = vmatpush.msra.mxu0 0.0
        %800 = vmatpush.msra.mxu0 0.0
        %801 = vmatpush.msra.mxu0 0.0
        %802 = vmatpush.msra.mxu0 0.0
        %803 = vmatpush.msra.mxu0 %v779
        %804 = vmatmul.f32.gmra.mxu0 %v786
        %v805 = vpop.f32.mrf.mxu0
        %v806 = vadd.f32 %v782, %v805
        %807 = vdwg.mxu0
        %v808 = vmax.f32 %v806, 0.0
        %v809 = vld [vmem:[%s7] sm:$0xff]
        %v810 = vld [vmem:[%s7 + $0x8] sm:$0xff]
        %v811 = vld [vmem:[%s7 + $0x10] sm:$0xff]
        %v812 = vld [vmem:[%s7 + $0x18] sm:$0xff]
        %v813 = vld [vmem:[%s8] sm:$0x1]
        %v815 = vperm.slane %v813, 0
        %vm817 = vcmask 261120
        %v819 = vsel %vm817, %v808, 0
        %821 = vmatpush.msra.mxu0 0.0
        %822 = vmatpush.msra.mxu0 0.0
        %823 = vmatpush.msra.mxu0 0.0
        %824 = vmatpush.msra.mxu0 0.0
        %825 = vmatpush.msra.mxu0 0.0
        %826 = vmatpush.msra.mxu0 0.0
        %827 = vmatpush.msra.mxu0 0.0
        %828 = vmatpush.msra.mxu0 0.0
        %829 = vmatpush.msra.mxu0 0.0
        %830 = vmatpush.msra.mxu0 0.0
        %831 = vmatpush.msra.mxu0 0.0
        %832 = vmatpush.msra.mxu0 0.0
        %833 = vmatpush.msra.mxu0 %v812
        %834 = vmatpush.msra.mxu0 %v811
        %835 = vmatpush.msra.mxu0 %v810
        %836 = vmatpush.msra.mxu0 %v809
        %837 = vmatmul.f32.gmra.mxu0 %v819
        %v838 = vpop.f32.mrf.mxu0
        %v839 = vadd.f32 %v815, %v838
        %840 = vdwg.mxu0
        %vm841 = vcmask 35840
        %v842 = vsel %vm841, %v839, -inf
        %843 = vmax.xlane.f32.xlu0 %v842
        %v844 = vpop.xlane.xlu0 %843
        %v845 = vsub.f32 %v839, %v844
        %v846 = vmul.f32 %v845, 1.442695
        %v847 = vpow.pop %v846
        %v848 = vsel %vm841, %v847, 0.0
        %849 = vadd.xlane.f32.xlu0 %v848
        %v850 = vpop.xlane.xlu0 %849
        %v851 = vlog2.pop %v850
        %v852 = vmul.f32 %v851, 0.6931472
        %v853 = vadd.f32 %v852, %v844
        %v854 = vsub.f32 %v839, %v853
        %855 = vst.msk [vmem:[%s325] sm:$0xf] %vm841, %v854
        %s856 = sand.u32 %s225, 1
        %s857 = scalar_lea.sflag [#allocation4], %s856
        %s858 = sand.u32 %s225, 1
        %s859 = smul.addr %s858, 4
        %s860 = scalar_lea.vmem [#allocation3], %s859
        // Predicated region
        $region57: #{multiclass_convnet_forward.1} parent=55 // pred_check
          %p861 = pneg %p235
        $region58: #{multiclass_convnet_forward.1} parent=55 // pred_check_branch
          %863 = sbr.rel (%p861) target = $region60
        $region59: #{multiclass_convnet_forward.1} parent=55 // pred_region
          %865 = vsyncadd %s857, 0
          %s866 = smul.addr %s23, 4
          %s867 = scalar_lea.hbm %s9, %s866
          %s869 = sshll.u32 %s860, 4
          %s870 = int_to_ptr.vmem [resolvable:$true] %s869
          %s871 = sshll.u32 %s867, 4
          %s872 = int_to_ptr.hbm [resolvable:$true] %s871
          %874 = dma.vmem_to_hbm [thread:$0]  %s870, 64, %s872, %s857
        $region60: #{multiclass_convnet_forward.1} parent=55 // pred_fallthru
          _
      $region56: #{multiclass_convnet_forward.1} parent=5 // pred_fallthru
        _
      %p875 = scmp.le.s32.totalorder 2, %s18
      // Predicated region
      $region61: #{multiclass_convnet_forward.1} parent=5 // pred_check
        %p876 = pneg %p875
      $region62: #{multiclass_convnet_forward.1} parent=5 // pred_check_branch
        %878 = sbr.rel (%p876) target = $region64
      $region63: #{multiclass_convnet_forward.1} parent=5 // pred_region
        %s879 = ssub.s32 %s18, 2
        // Predicated region
        $region65: #{multiclass_convnet_forward.1} parent=63 // pred_check
          %p880 = pneg %p241
        $region66: #{multiclass_convnet_forward.1} parent=63 // pred_check_branch
          %882 = sbr.rel (%p880) target = $region68
        $region67: #{multiclass_convnet_forward.1} parent=63 // pred_region
          %s883 = sand.u32 %s226, 1
          %s884 = scalar_lea.sflag [#allocation4], %s883
          %s885 = sand.u32 %s226, 1
          %s886 = smul.addr %s885, 4
          %s887 = scalar_lea.vmem [#allocation3], %s886
          %889 = dma.done %s884, 64
        $region68: #{multiclass_convnet_forward.1} parent=63 // pred_fallthru
          _
      $region64: #{multiclass_convnet_forward.1} parent=5 // pred_fallthru
        _
    $region6: #{multiclass_convnet_forward.1} parent=1 // loop_footer
      %s22 = sadd.s32 1, %s18
    $region7: #{multiclass_convnet_forward.1} parent=1 // loop_footer_branch
      %17 = sbr.rel target = $region3
    $region8: #{multiclass_convnet_forward.1} parent=1 // loop_exit
      _
    %890 = vsyncpa [#allocation4], 1
    %s891 = scalar_lea.sflag [#allocation4], 1
    %892 = vsyncpa %s891, 1

</llo_original>
